<compile_context>
chip_gen: v7x
topology: tpu7x:2x2x1
jax: 0.10.0
libtpu: 0.0.40
codegen_flags: <defaults>
</compile_context>

<pallas_src>
import functools

import jax
import jax.numpy as jnp
from jax.experimental import pallas as pl
from jax.experimental.pallas import tpu as pltpu


def _gat_kernel(x2_ref, adj_ref, fsrc_ref, fdst_ref, w_ref, o_ref, *, alpha, concat):
    bb, N, _ = adj_ref.shape

    # Hidden projection, batch fused into M; bf16 MXU operands, f32 accumulate.
    h2 = jnp.dot(x2_ref[...], w_ref[...],
                 preferred_element_type=jnp.float32)       # (bb*N, Fout) f32

    neg_inf = jnp.float32(-9e15)

    # Per-batch attention. bb is kept small by _pick_batch_block, so this
    # static unrolled loop keeps only a few (N, N) f32 temporaries live.
    for b in range(bb):
        h_b = h2[b * N:(b + 1) * N, :]                     # (N, Fout) f32

        # e[i, j] = f_src[i] + f_dst[j]   (pre-softmax path exact f32)
        e = fsrc_ref[b] + fdst_ref[b]                      # (N,1)+(1,N) -> (N,N)
        e = jnp.maximum(e, alpha * e)                      # LeakyReLU(alpha), 1 VALU op

        # adj is int8 in HBM/VMEM (4x smaller DMA); single f32 upcast keeps the
        # compare/select in one layout.  Exact reference semantics (incl. rows
        # with no neighbors -> uniform softmax).
        adj_b = adj_ref[b].astype(jnp.float32)             # (N, N)
        logits = jnp.where(adj_b > 0, e, neg_inf)

        # Row-wise softmax over neighbors; reciprocal on the EUP (free slot).
        m = jnp.max(logits, axis=-1, keepdims=True)
        p = jnp.exp(logits - m)
        s = jnp.sum(p, axis=-1, keepdims=True)
        att = p * pl.reciprocal(s, approx=True)            # (N, N) f32

        # TODO(synk): F.dropout on `att` omitted (inference / training=False).

        # h' = att @ h : bf16 MXU operands, f32 accumulation.
        hp = jnp.dot(att.astype(jnp.bfloat16),
                     h_b.astype(jnp.bfloat16),
                     preferred_element_type=jnp.float32)   # (N, Fout)

        if concat:
            # ELU(1.0); clamp the exp argument so the dead branch never infs.
            hp = jnp.where(hp > 0, hp, jnp.exp(jnp.minimum(hp, 0.0)) - 1.0)

        o_ref[b * N:(b + 1) * N, :] = hp.astype(o_ref.dtype)


def _estimate_vmem_bytes(bb, N, Fin, Fout):
    """Per-grid-step VMEM footprint, incl. double buffering + live temporaries."""
    dbl = 2  # Pallas double-buffers every BlockSpec'd input/output.
    inputs = dbl * (bb * N * Fin * 2        # x   (bf16)
                    + bb * N * N * 1        # adj (int8)
                    + 2 * bb * N * 4        # f_src + f_dst (f32)
                    + Fin * Fout * 2)       # W   (bf16)
    outputs = dbl * bb * N * Fout * 4       # out (f32)
    live = bb * N * Fout * 4                # h2  (f32)
    live += bb * 4 * N * N * 4              # e/logits/p/att f32 temporaries
    return inputs + outputs + live


def _pick_batch_block(B, N, Fin, Fout, *, budget_bytes=12 << 20, max_rows=512):
    # Cap rows so the fused projection M-dim stays reasonable and the (N,N)
    # temporaries fit; keep >= 2 grid steps when B >= 2 so both v7x TCs work.
    cap = max(1, min(B, max_rows // max(1, N)))
    if B >= 2:
        cap = max(1, min(cap, B // 2))
    bb = 1
    for cand in range(cap, 0, -1):
        if B % cand == 0 and _estimate_vmem_bytes(cand, N, Fin, Fout) <= budget_bytes:
            bb = cand
            break
    return bb


def graph_attention_layer(x, adj, W, a, *, alpha=0.2, concat=True):
    """x: (B,N,Fin) f32, adj: (B,N,N), W: (Fin,Fout) f32, a: (2*Fout,1) f32."""
    B, N, Fin = x.shape
    Fout = W.shape[1]
    bb = _pick_batch_block(B, N, Fin, Fout)

    # Attention coefficients hoisted out of the kernel (exact f32, tiny):
    #   f[..., 0] = h · a1,  f[..., 1] = h · a2,  with  h = x @ W,
    # computed as x @ (W @ [a1|a2]) so no (B,N,Fout) intermediate is needed
    # and no narrow (...,2) matmul / sublane->lane reshape hits the kernel.
    a_packed = jnp.concatenate([a[:Fout, :], a[Fout:, :]], axis=1)   # (Fout, 2)
    wa = jnp.matmul(W, a_packed)                                     # (Fin, 2)
    f = jnp.einsum('bni,ij->bnj', x, wa)                             # (B, N, 2) f32
    f_src = f[:, :, 0:1]                                             # (B, N, 1)
    f_dst = jnp.swapaxes(f[:, :, 1:2], 1, 2)                         # (B, 1, N)

    # Kernel-side DMA reduction: x in bf16 (only feeds the bf16 MXU matmul),
    # adjacency as an int8 0/1 mask.
    x2 = x.reshape(B * N, Fin).astype(jnp.bfloat16)
    w_bf16 = W.astype(jnp.bfloat16)
    adj_i8 = adj if adj.dtype == jnp.int8 else (adj > 0).astype(jnp.int8)

    est = _estimate_vmem_bytes(bb, N, Fin, Fout)
    vmem_limit = int(min(max(2 * est + (1 << 20), 32 << 20), 40 << 20))

    kernel = functools.partial(_gat_kernel, alpha=float(alpha), concat=bool(concat))

    # TODO(synk): for large N (>~1K), tile the neighbor axis with an
    # online-softmax accumulator instead of materializing (N, N) per batch.
    out2 = pl.pallas_call(
        kernel,
        out_shape=jax.ShapeDtypeStruct((B * N, Fout), x.dtype),
        grid_spec=pltpu.PrefetchScalarGridSpec(
            num_scalar_prefetch=0,
            grid=(B // bb,),
            in_specs=[
                pl.BlockSpec((bb * N, Fin), lambda i: (i, 0)),    # x (bf16, batch-fused)
                pl.BlockSpec((bb, N, N), lambda i: (i, 0, 0)),    # adj (int8)
                pl.BlockSpec((bb, N, 1), lambda i: (i, 0, 0)),    # f_src (f32)
                pl.BlockSpec((bb, 1, N), lambda i: (i, 0, 0)),    # f_dst (f32)
                pl.BlockSpec((Fin, Fout), lambda i: (0, 0)),      # W (bf16, shared)
            ],
            out_specs=pl.BlockSpec((bb * N, Fout), lambda i: (i, 0)),
        ),
        compiler_params=pltpu.CompilerParams(
            dimension_semantics=("parallel",),
            vmem_limit_bytes=vmem_limit,
        ),
    )(x2, adj_i8, f_src, f_dst, w_bf16)

    return out2.reshape(B, N, Fout)


def _reference(x, adj, W, a, alpha, concat):
    """Pure-JAX f32 reference, literal transcription of the PyTorch forward."""
    h = jnp.matmul(x, W)                                        # (B, N, F)
    B, N, F = h.shape
    h_i = jnp.broadcast_to(h[:, :, None, :], (B, N, N, F))      # h[b, i]
    h_j = jnp.broadcast_to(h[:, None, :, :], (B, N, N, F))      # h[b, j]
    a_input = jnp.concatenate([h_i, h_j], axis=-1)              # (B, N, N, 2F)
    e = jnp.squeeze(jnp.matmul(a_input, a), -1)                 # (B, N, N)
    e = jnp.where(e > 0, e, alpha * e)                          # LeakyReLU
    att = jax.nn.softmax(jnp.where(adj > 0, e, -9e15), axis=2)
    h_prime = jnp.matmul(att, h)
    return jax.nn.elu(h_prime) if concat else h_prime


if __name__ == "__main__":
    B, N, Fin, Fout = 2, 16, 8, 32
    alpha = 0.2   # LeakyReLU slope
    # dropout = 0.6 is a no-op at inference (training=False); see TODO in kernel.

    key = jax.random.PRNGKey(0)
    kx, kadj, kw, ka = jax.random.split(key, 4)

    x = jax.random.normal(kx, (B, N, Fin), dtype=jnp.float32)
    adj = (jax.random.uniform(kadj, (B, N, N)) > 0.5).astype(jnp.float32)

    # Xavier-uniform-style init with gain=1.414 (matches the PyTorch init family).
    lim_w = 1.414 * (6.0 / (Fin + Fout)) ** 0.5
    W = jax.random.uniform(kw, (Fin, Fout), jnp.float32, -lim_w, lim_w)
    lim_a = 1.414 * (6.0 / (2 * Fout + 1)) ** 0.5
    a = jax.random.uniform(ka, (2 * Fout, 1), jnp.float32, -lim_a, lim_a)

    out = graph_attention_layer(x, adj, W, a, alpha=alpha, concat=True)
    out = jax.block_until_ready(out)

    ref = _reference(x, adj, W, a, alpha, True)
    assert out.shape == (B, N, Fout)
    max_err = float(jnp.max(jnp.abs(out - ref)))
    # bf16 MXU operands + approx reciprocal -> relaxed (but tight-enough) tolerance.
    assert jnp.allclose(out, ref, atol=2e-2, rtol=2e-2), f"max abs err = {max_err}"

    print("KERNEL_OK")
</pallas_src>

<mosaic_0001>
module attributes {stable_mosaic.version = 11 : i64} {
  func.func @_gat_kernel(%arg0: i32, %arg1: memref<16x8xbf16, #tpu.memory_space<vmem>>, %arg2: memref<1x16x16xi8, #tpu.memory_space<vmem>>, %arg3: memref<1x16x1xf32, #tpu.memory_space<vmem>>, %arg4: memref<1x1x16xf32, #tpu.memory_space<vmem>>, %arg5: memref<8x32xbf16, #tpu.memory_space<vmem>>, %arg6: memref<16x32xf32, #tpu.memory_space<vmem>>) attributes {dimension_semantics = [#tpu.dimension_semantics<parallel>], iteration_bounds = array<i64: 2>, scalar_prefetch = 0 : i64, scratch_operands = 0 : i64, tpu.core_type = #tpu.core_type<tc>, window_params = [{transform_indices = @transform_0, window_bounds = array<i64: 16, 8>}, {transform_indices = @transform_1, window_bounds = array<i64: 1, 16, 16>}, {transform_indices = @transform_2, window_bounds = array<i64: 1, 16, 1>}, {transform_indices = @transform_3, window_bounds = array<i64: 1, 1, 16>}, {pipeline_mode = #tpu.pipeline_mode<synchronous>, transform_indices = @transform_4, window_bounds = array<i64: 8, 32>}, {transform_indices = @transform_5, window_bounds = array<i64: 16, 32>}]} {
    %c0 = arith.constant 0 : index
    %c0_0 = arith.constant 0 : index
    %0 = vector.load %arg1[%c0, %c0_0] : memref<16x8xbf16, #tpu.memory_space<vmem>>, vector<16x8xbf16>
    %c0_1 = arith.constant 0 : index
    %c0_2 = arith.constant 0 : index
    %1 = vector.load %arg5[%c0_1, %c0_2] : memref<8x32xbf16, #tpu.memory_space<vmem>>, vector<8x32xbf16>
    %cst = arith.constant dense<0.000000e+00> : vector<16x32xf32>
    %2 = tpu.matmul %0, %1, %cst {dimension_numbers = #tpu.dot_dimension_numbers<[1], [0], [0], [1], [0, 0, 1, 1], [], []>} : vector<16x8xbf16>, vector<8x32xbf16>, vector<16x32xf32> -> vector<16x32xf32>
    %c0_3 = arith.constant 0 : index
    %c0_4 = arith.constant 0 : index
    %c0_5 = arith.constant 0 : index
    %3 = vector.load %arg3[%c0_3, %c0_4, %c0_5] : memref<1x16x1xf32, #tpu.memory_space<vmem>>, vector<1x16x1xf32>
    %4 = vector.shape_cast %3 : vector<1x16x1xf32> to vector<16x1xf32>
    %c0_6 = arith.constant 0 : index
    %c0_7 = arith.constant 0 : index
    %c0_8 = arith.constant 0 : index
    %5 = vector.load %arg4[%c0_6, %c0_7, %c0_8] : memref<1x1x16xf32, #tpu.memory_space<vmem>>, vector<1x1x16xf32>
    %6 = vector.shape_cast %5 : vector<1x1x16xf32> to vector<1x16xf32>
    %7 = vector.broadcast %4 : vector<16x1xf32> to vector<16x16xf32>
    %8 = vector.broadcast %6 : vector<1x16xf32> to vector<16x16xf32>
    %9 = arith.addf %7, %8 : vector<16x16xf32>
    %cst_9 = arith.constant 2.000000e-01 : f32
    %10 = vector.broadcast %cst_9 : f32 to vector<16x16xf32>
    %11 = arith.mulf %10, %9 : vector<16x16xf32>
    %12 = arith.maximumf %9, %11 : vector<16x16xf32>
    %c0_10 = arith.constant 0 : index
    %c0_11 = arith.constant 0 : index
    %c0_12 = arith.constant 0 : index
    %13 = vector.load %arg2[%c0_10, %c0_11, %c0_12] : memref<1x16x16xi8, #tpu.memory_space<vmem>>, vector<1x16x16xi8>
    %14 = vector.shape_cast %13 : vector<1x16x16xi8> to vector<16x16xi8>
    %15 = arith.sitofp %14 : vector<16x16xi8> to vector<16x16xf32>
    %cst_13 = arith.constant 0.000000e+00 : f32
    %16 = vector.broadcast %cst_13 : f32 to vector<16x16xf32>
    %17 = arith.cmpf ogt, %15, %16 : vector<16x16xf32>
    %cst_14 = arith.constant -9.000000e+15 : f32
    %18 = vector.broadcast %cst_14 : f32 to vector<16x16xf32>
    %19 = arith.select %17, %12, %18 : vector<16x16xi1>, vector<16x16xf32>
    %cst_15 = arith.constant dense<0xFF800000> : vector<16xf32>
    %20 = vector.multi_reduction <maximumf>, %19, %cst_15 [1] : vector<16x16xf32> to vector<16xf32>
    %21 = vector.shape_cast %20 : vector<16xf32> to vector<16x1xf32>
    %22 = vector.broadcast %21 : vector<16x1xf32> to vector<16x16xf32>
    %23 = arith.subf %19, %22 : vector<16x16xf32>
    %24 = math.exp %23 : vector<16x16xf32>
    %cst_16 = arith.constant dense<0.000000e+00> : vector<16xf32>
    %25 = vector.multi_reduction <add>, %24, %cst_16 [1] : vector<16x16xf32> to vector<16xf32>
    %26 = vector.shape_cast %25 : vector<16xf32> to vector<16x1xf32>
    %27 = tpu.reciprocal %26 {approx = true} : vector<16x1xf32> -> vector<16x1xf32>
    %28 = vector.broadcast %27 : vector<16x1xf32> to vector<16x16xf32>
    %29 = arith.mulf %24, %28 : vector<16x16xf32>
    %30 = arith.truncf %29 : vector<16x16xf32> to vector<16x16xbf16>
    %31 = arith.truncf %2 : vector<16x32xf32> to vector<16x32xbf16>
    %cst_17 = arith.constant dense<0.000000e+00> : vector<16x32xf32>
    %32 = tpu.matmul %30, %31, %cst_17 {dimension_numbers = #tpu.dot_dimension_numbers<[1], [0], [0], [1], [0, 0, 1, 1], [], []>} : vector<16x16xbf16>, vector<16x32xbf16>, vector<16x32xf32> -> vector<16x32xf32>
    %cst_18 = arith.constant 0.000000e+00 : f32
    %33 = vector.broadcast %cst_18 : f32 to vector<16x32xf32>
    %34 = arith.cmpf ogt, %32, %33 : vector<16x32xf32>
    %cst_19 = arith.constant 0.000000e+00 : f32
    %35 = vector.broadcast %cst_19 : f32 to vector<16x32xf32>
    %36 = arith.minimumf %32, %35 : vector<16x32xf32>
    %37 = math.exp %36 : vector<16x32xf32>
    %cst_20 = arith.constant 1.000000e+00 : f32
    %38 = vector.broadcast %cst_20 : f32 to vector<16x32xf32>
    %39 = arith.subf %37, %38 : vector<16x32xf32>
    %40 = arith.select %34, %32, %39 : vector<16x32xi1>, vector<16x32xf32>
    %c0_21 = arith.constant 0 : index
    %c0_22 = arith.constant 0 : index
    %41 = vector.load %arg6[%c0_21, %c0_22] : memref<16x32xf32, #tpu.memory_space<vmem>>, vector<16x32xf32>
    tpu.vector_store %arg6[%c0_21, %c0_22], %40 {strides = array<i32>} : memref<16x32xf32, #tpu.memory_space<vmem>>, vector<16x32xf32>,
    return
  }
  func.func @transform_0(%arg0: i32) -> (i32, i32) {
    %c0_i32 = arith.constant 0 : i32
    %c0_i32_0 = arith.constant 0 : i32
    return %arg0, %c0_i32 : i32, i32
  }
  func.func @transform_1(%arg0: i32) -> (i32, i32, i32) {
    %c0_i32 = arith.constant 0 : i32
    %c0_i32_0 = arith.constant 0 : i32
    %c0_i32_1 = arith.constant 0 : i32
    return %arg0, %c0_i32, %c0_i32_0 : i32, i32, i32
  }
  func.func @transform_2(%arg0: i32) -> (i32, i32, i32) {
    %c0_i32 = arith.constant 0 : i32
    %c0_i32_0 = arith.constant 0 : i32
    %c0_i32_1 = arith.constant 0 : i32
    return %arg0, %c0_i32, %c0_i32_0 : i32, i32, i32
  }
  func.func @transform_3(%arg0: i32) -> (i32, i32, i32) {
    %c0_i32 = arith.constant 0 : i32
    %c0_i32_0 = arith.constant 0 : i32
    %c0_i32_1 = arith.constant 0 : i32
    return %arg0, %c0_i32, %c0_i32_0 : i32, i32, i32
  }
  func.func @transform_4(%arg0: i32) -> (i32, i32) {
    %c0_i32 = arith.constant 0 : i32
    %c0_i32_0 = arith.constant 0 : i32
    %c0_i32_1 = arith.constant 0 : i32
    return %c0_i32, %c0_i32_0 : i32, i32
  }
  func.func @transform_5(%arg0: i32) -> (i32, i32) {
    %c0_i32 = arith.constant 0 : i32
    %c0_i32_0 = arith.constant 0 : i32
    return %arg0, %c0_i32 : i32, i32
  }
}

</mosaic_0001>

<llo_original>
// kernel: tpu_custom_call.1
$region0: #{tpu_custom_call.1}
  #allocation0 [shape = 'u32[]', space=smem, size = 0x4, offset = 0x4, fixed_abs, tag = 'smem constant byte address 0x4 - core index']
  #allocation1 [shape = 'u32[144,128]{1,0:T(1,128)}', space=vmem, size = 0x12000, scoped, tag = 'internal scratch']
  %s0 = inlined_call_operand.vmem [shape: bf16[32,8], index: 0, kind: input, shape index: {}]
  %s1 = inlined_call_operand.vmem [shape: s8[2,16,16], index: 1, kind: input, shape index: {}]
  %s2 = inlined_call_operand.vmem [shape: f32[2,16,1], index: 2, kind: input, shape index: {}]
  %s3 = inlined_call_operand.vmem [shape: f32[2,1,16], index: 3, kind: input, shape index: {}]
  %s4 = inlined_call_operand.vmem [shape: bf16[8,32], index: 4, kind: input, shape index: {}]
  %s5 = inlined_call_operand.hbm [shape: f32[32,32], index: 5, kind: output, shape index: {}]
  %s6 = sld [smem:[#allocation0]]
  $region53: #{tpu_custom_call.1} parent=0
    _
  %s8 = ssub.s32 1, %s6
  %s9 = scalar_select 0, %s8, %s6
  $region1: #{tpu_custom_call.1} parent=0
    #allocation2 [shape = 'u8[16384]{0}', space=vmem, size = 0x4000, scoped, tag = 'output window, operand 0']
    #allocation3 [shape = 's32[2]{0}', space=sflag, size = 0x8, scoped, tag = 'scoped memory for tpu_custom_call.1']
    %10 = vsyncpa [#allocation3], 0
    %s11 = scalar_lea.sflag [#allocation3], 1
    %12 = vsyncpa %s11, 0
    loop: start=0, step=1, limit=4
    $region2: #{tpu_custom_call.1} parent=1 // loop_pre_header
      _
    $region3: #{tpu_custom_call.1} parent=1 // loop_header
      %s14 = sphi 0, %s18
      %p15 = scmp.ge.s32.totalorder %s14, 4
      %s24 = sphi 0, %s26
      %s27 = sphi 0, %s24
      %s28 = sphi 0, %s27
      %s44 = sphi 0, %s28
      %s50 = sphi 0, %s52
      %s53 = sphi 0, %s50
      %s54 = sphi 0, %s53
      %s70 = sphi 0, %s54
      %s76 = sphi 0, %s78
      %s79 = sphi 0, %s76
      %s80 = sphi 0, %s79
      %s96 = sphi 0, %s80
      %s102 = sphi 0, %s104
      %s105 = sphi 0, %s102
      %s106 = sphi 0, %s105
      %s122 = sphi 0, %s106
      %s126 = sphi 0, %s126
      %s128 = sphi 0, %s126
      %s129 = sphi 0, %s128
      %s143 = sphi 0, %s129
      %s149 = sphi 0, %s151
      %s152 = sphi 0, %s149
      %s153 = sphi 0, %s152
      %s169 = sphi 0, %s153
    $region4: #{tpu_custom_call.1} parent=1 // loop_header_branch
      %17 = sbr.rel (%p15) target = $region8
    $region5: #{tpu_custom_call.1} parent=1 // loop_body
      %s19 = ssub.s32 %s14, 1
      %s20 = ssub.s32 %s14, 2
      %s21 = sadd.s32 %s14, 1
      %s22 = ssub.s32 %s14, %s21
      %p23 = scmp.eq.s32.totalorder %s22, 0
      %s25 = sadd.s32 %s24, 1
      %s26 = scalar_select %p23, %s24, %s25
      %p29 = pneg %p23
      %p30 = scmp.eq.s32.totalorder %s14, 1
      %p31 = por %p29, %p30
      %p32 = scmp.ne.s32.totalorder %s24, %s27
      %p33 = scmp.eq.s32.totalorder %s14, 0
      %p34 = por %p32, %p33
      %p35 = scmp.ne.s32.totalorder %s24, %s27
      %p36 = scmp.eq.s32.totalorder %s19, 1
      %p37 = por %p35, %p36
      %p38 = scmp.ne.s32.totalorder %s27, %s28
      %p39 = scmp.eq.s32.totalorder %s19, 0
      %p40 = por %p38, %p39
      %p41 = scmp.ne.s32.totalorder %s27, %s28
      %p42 = scmp.eq.s32.totalorder %s20, 1
      %p43 = por %p41, %p42
      %p45 = scmp.ne.s32.totalorder %s28, %s44
      %p46 = scmp.eq.s32.totalorder %s20, 0
      %p47 = por %p45, %p46
      %s48 = ssub.s32 %s14, %s21
      %p49 = scmp.eq.s32.totalorder %s48, 0
      %s51 = sadd.s32 %s50, 1
      %s52 = scalar_select %p49, %s50, %s51
      %p55 = pneg %p49
      %p56 = scmp.eq.s32.totalorder %s14, 1
      %p57 = por %p55, %p56
      %p58 = scmp.ne.s32.totalorder %s50, %s53
      %p59 = scmp.eq.s32.totalorder %s14, 0
      %p60 = por %p58, %p59
      %p61 = scmp.ne.s32.totalorder %s50, %s53
      %p62 = scmp.eq.s32.totalorder %s19, 1
      %p63 = por %p61, %p62
      %p64 = scmp.ne.s32.totalorder %s53, %s54
      %p65 = scmp.eq.s32.totalorder %s19, 0
      %p66 = por %p64, %p65
      %p67 = scmp.ne.s32.totalorder %s53, %s54
      %p68 = scmp.eq.s32.totalorder %s20, 1
      %p69 = por %p67, %p68
      %p71 = scmp.ne.s32.totalorder %s54, %s70
      %p72 = scmp.eq.s32.totalorder %s20, 0
      %p73 = por %p71, %p72
      %s74 = ssub.s32 %s14, %s21
      %p75 = scmp.eq.s32.totalorder %s74, 0
      %s77 = sadd.s32 %s76, 1
      %s78 = scalar_select %p75, %s76, %s77
      %p81 = pneg %p75
      %p82 = scmp.eq.s32.totalorder %s14, 1
      %p83 = por %p81, %p82
      %p84 = scmp.ne.s32.totalorder %s76, %s79
      %p85 = scmp.eq.s32.totalorder %s14, 0
      %p86 = por %p84, %p85
      %p87 = scmp.ne.s32.totalorder %s76, %s79
      %p88 = scmp.eq.s32.totalorder %s19, 1
      %p89 = por %p87, %p88
      %p90 = scmp.ne.s32.totalorder %s79, %s80
      %p91 = scmp.eq.s32.totalorder %s19, 0
      %p92 = por %p90, %p91
      %p93 = scmp.ne.s32.totalorder %s79, %s80
      %p94 = scmp.eq.s32.totalorder %s20, 1
      %p95 = por %p93, %p94
      %p97 = scmp.ne.s32.totalorder %s80, %s96
      %p98 = scmp.eq.s32.totalorder %s20, 0
      %p99 = por %p97, %p98
      %s100 = ssub.s32 %s14, %s21
      %p101 = scmp.eq.s32.totalorder %s100, 0
      %s103 = sadd.s32 %s102, 1
      %s104 = scalar_select %p101, %s102, %s103
      %p107 = pneg %p101
      %p108 = scmp.eq.s32.totalorder %s14, 1
      %p109 = por %p107, %p108
      %p110 = scmp.ne.s32.totalorder %s102, %s105
      %p111 = scmp.eq.s32.totalorder %s14, 0
      %p112 = por %p110, %p111
      %p113 = scmp.ne.s32.totalorder %s102, %s105
      %p114 = scmp.eq.s32.totalorder %s19, 1
      %p115 = por %p113, %p114
      %p116 = scmp.ne.s32.totalorder %s105, %s106
      %p117 = scmp.eq.s32.totalorder %s19, 0
      %p118 = por %p116, %p117
      %p119 = scmp.ne.s32.totalorder %s105, %s106
      %p120 = scmp.eq.s32.totalorder %s20, 1
      %p121 = por %p119, %p120
      %p123 = scmp.ne.s32.totalorder %s106, %s122
      %p124 = scmp.eq.s32.totalorder %s20, 0
      %p125 = por %p123, %p124
      %s127 = sadd.s32 %s126, 1
      %p130 = scmp.eq.s32.totalorder %s14, 1
      %p131 = scmp.ne.s32.totalorder %s126, %s128
      %p132 = scmp.eq.s32.totalorder %s14, 0
      %p133 = por %p131, %p132
      %p134 = scmp.ne.s32.totalorder %s126, %s128
      %p135 = scmp.eq.s32.totalorder %s19, 1
      %p136 = por %p134, %p135
      %p137 = scmp.ne.s32.totalorder %s128, %s129
      %p138 = scmp.eq.s32.totalorder %s19, 0
      %p139 = por %p137, %p138
      %p140 = scmp.ne.s32.totalorder %s128, %s129
      %p141 = scmp.eq.s32.totalorder %s20, 1
      %p142 = por %p140, %p141
      %p144 = scmp.ne.s32.totalorder %s129, %s143
      %p145 = scmp.eq.s32.totalorder %s20, 0
      %p146 = por %p144, %p145
      %s147 = ssub.s32 %s14, %s21
      %p148 = scmp.eq.s32.totalorder %s147, 0
      %s150 = sadd.s32 %s149, 1
      %s151 = scalar_select %p148, %s149, %s150
      %p154 = pneg %p148
      %p155 = scmp.eq.s32.totalorder %s14, 1
      %p156 = por %p154, %p155
      %p157 = scmp.ne.s32.totalorder %s149, %s152
      %p158 = scmp.eq.s32.totalorder %s14, 0
      %p159 = por %p157, %p158
      %p160 = scmp.ne.s32.totalorder %s149, %s152
      %p161 = scmp.eq.s32.totalorder %s19, 1
      %p162 = por %p160, %p161
      %p163 = scmp.ne.s32.totalorder %s152, %s153
      %p164 = scmp.eq.s32.totalorder %s19, 0
      %p165 = por %p163, %p164
      %p166 = scmp.ne.s32.totalorder %s152, %s153
      %p167 = scmp.eq.s32.totalorder %s20, 1
      %p168 = por %p166, %p167
      %p170 = scmp.ne.s32.totalorder %s153, %s169
      %p171 = scmp.eq.s32.totalorder %s20, 0
      %p172 = por %p170, %p171
      %p173 = scmp.le.s32.totalorder 1, %s14
      %p174 = scmp.lt.s32.totalorder %s14, 3
      %p175 = pnand %p173, %p174
      %p176 = pneg %p175
      // Predicated region
      $region9: #{tpu_custom_call.1} parent=5 // pred_check
        _
      $region10: #{tpu_custom_call.1} parent=5 // pred_check_branch
        %178 = sbr.rel (%p175) target = $region12
      $region11: #{tpu_custom_call.1} parent=5 // pred_region
        %s179 = ssub.s32 %s14, 1
        // Predicated region
        $region13: #{tpu_custom_call.1} parent=11 // pred_check
          %p180 = pneg %p139
        $region14: #{tpu_custom_call.1} parent=11 // pred_check_branch
          %182 = sbr.rel (%p180) target = $region16
        $region15: #{tpu_custom_call.1} parent=11 // pred_region
          _
        $region16: #{tpu_custom_call.1} parent=11 // pred_fallthru
          _
      $region12: #{tpu_custom_call.1} parent=5 // pred_fallthru
        _
      %p183 = scmp.lt.s32.totalorder %s14, 2
      // Predicated region
      $region17: #{tpu_custom_call.1} parent=5 // pred_check
        %p184 = pneg %p183
      $region18: #{tpu_custom_call.1} parent=5 // pred_check_branch
        %186 = sbr.rel (%p184) target = $region20
      $region19: #{tpu_custom_call.1} parent=5 // pred_region
        // Predicated region
        $region21: #{tpu_custom_call.1} parent=19 // pred_check
          %p187 = pneg %p34
        $region22: #{tpu_custom_call.1} parent=19 // pred_check_branch
          %189 = sbr.rel (%p187) target = $region24
        $region23: #{tpu_custom_call.1} parent=19 // pred_region
          %s190 = smul.u32 2, %s14
          %p191 = scmp.lt.s32.totalorder %s190, 3
          %s192 = scalar_select %p191, %s190, 3
          %s193 = smul.addr %s192, 4
          %s194 = scalar_lea.vmem %s0, %s193
          %s195 = smul.u32 2, %s14
        $region24: #{tpu_custom_call.1} parent=19 // pred_fallthru
          _
        // Predicated region
        $region25: #{tpu_custom_call.1} parent=19 // pred_check
          %p196 = pneg %p60
        $region26: #{tpu_custom_call.1} parent=19 // pred_check_branch
          %198 = sbr.rel (%p196) target = $region28
        $region27: #{tpu_custom_call.1} parent=19 // pred_region
          %p199 = scmp.lt.s32.totalorder %s14, 1
          %s200 = scalar_select %p199, %s14, 1
          %s201 = smul.addr %s200, 2
          %s202 = smul.addr %s201, 2
          %s203 = scalar_lea.vmem %s1, %s202
        $region28: #{tpu_custom_call.1} parent=19 // pred_fallthru
          _
        // Predicated region
        $region29: #{tpu_custom_call.1} parent=19 // pred_check
          %p204 = pneg %p86
        $region30: #{tpu_custom_call.1} parent=19 // pred_check_branch
          %206 = sbr.rel (%p204) target = $region32
        $region31: #{tpu_custom_call.1} parent=19 // pred_region
          %p207 = scmp.lt.s32.totalorder %s14, 1
          %s208 = scalar_select %p207, %s14, 1
          %s209 = smul.addr %s208, 2
          %s210 = smul.addr %s209, 8
          %s211 = scalar_lea.vmem %s2, %s210
        $region32: #{tpu_custom_call.1} parent=19 // pred_fallthru
          _
        // Predicated region
        $region33: #{tpu_custom_call.1} parent=19 // pred_check
          %p212 = pneg %p112
        $region34: #{tpu_custom_call.1} parent=19 // pred_check_branch
          %214 = sbr.rel (%p212) target = $region36
        $region35: #{tpu_custom_call.1} parent=19 // pred_region
          %p215 = scmp.lt.s32.totalorder %s14, 1
          %s216 = scalar_select %p215, %s14, 1
          %s217 = scalar_lea.vmem %s3, %s216
        $region36: #{tpu_custom_call.1} parent=19 // pred_fallthru
          _
      $region20: #{tpu_custom_call.1} parent=5 // pred_fallthru
        _
      %p218 = scmp.le.s32.totalorder 1, %s14
      %p219 = scmp.lt.s32.totalorder %s14, 3
      %p220 = pnand %p218, %p219
      %p221 = pneg %p220
      // Predicated region
      $region37: #{tpu_custom_call.1} parent=5 // pred_check
        _
      $region38: #{tpu_custom_call.1} parent=5 // pred_check_branch
        %223 = sbr.rel (%p220) target = $region40
      $region39: #{tpu_custom_call.1} parent=5 // pred_region
        %s224 = ssub.s32 %s14, 1
        %s225 = smul.u32 2, %s19
        %p226 = scmp.lt.s32.totalorder %s225, 3
        %s227 = scalar_select %p226, %s225, 3
        %s228 = smul.addr %s227, 4
        %s229 = scalar_lea.vmem %s0, %s228
        %p230 = pneg %p40
        %p231 = pneg %p37
        %p232 = scmp.lt.s32.totalorder %s19, 1
        %s233 = scalar_select %p232, %s19, 1
        %s234 = smul.addr %s233, 2
        %s235 = smul.addr %s234, 2
        %s236 = scalar_lea.vmem %s1, %s235
        %p237 = pneg %p66
        %p238 = pneg %p63
        %p239 = scmp.lt.s32.totalorder %s19, 1
        %s240 = scalar_select %p239, %s19, 1
        %s241 = smul.addr %s240, 2
        %s242 = smul.addr %s241, 8
        %s243 = scalar_lea.vmem %s2, %s242
        %p244 = pneg %p92
        %p245 = pneg %p89
        %p246 = scmp.lt.s32.totalorder %s19, 1
        %s247 = scalar_select %p246, %s19, 1
        %s248 = scalar_lea.vmem %s3, %s247
        %p249 = pneg %p118
        %p250 = pneg %p115
        %p251 = pneg %p139
        %p252 = pneg %p136
        %p253 = pneg %p165
        %p254 = pneg %p162
        %s255 = sand.u32 %s152, 1
        %s256 = scalar_lea.sflag [#allocation3], %s255
        %s257 = sand.u32 %s152, 1
        %s258 = smul.addr %s257, 16
        %s259 = scalar_lea.vmem [#allocation2], %s258
        %s260 = smul.u32 2, %s19
        %p261 = scmp.lt.s32.totalorder %s260, 3
        %s262 = scalar_select %p261, %s260, 3
        %s263 = smul.addr %s262, 4
        %s264 = scalar_lea.vmem %s0, %s263
        %s265 = smul.u32 2, %s19
        %p266 = scmp.lt.s32.totalorder %s19, 1
        %s267 = scalar_select %p266, %s19, 1
        %s268 = smul.addr %s267, 2
        %s269 = smul.addr %s268, 2
        %s270 = scalar_lea.vmem %s1, %s269
        %p271 = scmp.lt.s32.totalorder %s19, 1
        %s272 = scalar_select %p271, %s19, 1
        %s273 = smul.addr %s272, 2
        %s274 = smul.addr %s273, 8
        %s275 = scalar_lea.vmem %s2, %s274
        %p276 = scmp.lt.s32.totalorder %s19, 1
        %s277 = scalar_select %p276, %s19, 1
        %s278 = scalar_lea.vmem %s3, %s277
        %s279 = smul.u32 2, %s19
        %v281 = vld [vmem:[%s264] sm:$0xf]
        %v282 = vld [vmem:[%s264 + $0x4] sm:$0xf]
        %v283 = vld [vmem:[%s4] sm:$0xf]
        %v286 = vunpack.c.l.b16 %v281
        %v287 = vunpack.c.l.b16 %v282
        %v288 = vpack.c.b16 %v287, %v286
        %vm289 = vcmask 64512
        %v291 = vsel %vm289, %v288, 0
        %vm293 = vcmask 1043456
        %v295 = vsel %vm293, %v283, 0
        %297 = vmatprep.subr.bf16.mxu0 0
        %298 = vmatpush1.bf16.msra.mxu0 %v295
        %299 = vmatprep.subr.bf16.mxu0 0
        %300 = vmatpush1.bf16.msra.mxu0 0
        %301 = vmatprep.subr.bf16.mxu0 0
        %302 = vmatpush1.bf16.msra.mxu0 0
        %303 = vmatprep.subr.bf16.mxu0 0
        %304 = vmatpush1.bf16.msra.mxu0 0
        %305 = vmatprep.subr.bf16.mxu0 0
        %306 = vmatpush1.bf16.msra.mxu0 0
        %307 = vmatprep.subr.bf16.mxu0 0
        %308 = vmatpush1.bf16.msra.mxu0 0
        %309 = vmatprep.subr.bf16.mxu0 0
        %310 = vmatpush1.bf16.msra.mxu0 0
        %311 = vmatprep.subr.bf16.mxu0 0
        %312 = vmatpush1.bf16.msra.mxu0 0
        %313 = vmatprep.subr.bf16.mxu0 0
        %314 = vmatpush1.bf16.msra.mxu0 0
        %315 = vmatprep.subr.bf16.mxu0 0
        %316 = vmatpush1.bf16.msra.mxu0 0
        %317 = vmatprep.subr.bf16.mxu0 0
        %318 = vmatpush1.bf16.msra.mxu0 0
        %319 = vmatprep.subr.bf16.mxu0 0
        %320 = vmatpush1.bf16.msra.mxu0 0
        %321 = vmatprep.subr.bf16.mxu0 0
        %322 = vmatpush1.bf16.msra.mxu0 0
        %323 = vmatprep.subr.bf16.mxu0 0
        %324 = vmatpush1.bf16.msra.mxu0 0
        %325 = vmatprep.subr.bf16.mxu0 0
        %326 = vmatpush1.bf16.msra.mxu0 0
        %327 = vmatprep.subr.bf16.mxu0 0
        %328 = vmatpush1.bf16.msra.mxu0 0
        %329 = vmatprep.mubr.bf16.mxu0 0
        %330 = vmatmul.mubr.bf16.gmra.mrb[0].mxu0 %v291
        %v331 = vpop.f32.mrb[0].mxu0
        %v332 = vadd.f32 0.0, %v331
        %v333 = vpop.f32.mrb[0].mxu0
        %v334 = vpop.f32.mrb[0].mxu0
        %v335 = vadd.f32 0.0, %v334
        %v336 = vpop.f32.mrb[0].mxu0
        %337 = vdwg.mxu0
        %v338 = vld [vmem:[%s275] sm:$0xff]
        %v339 = vld [vmem:[%s275 + $0x8] sm:$0xff]
        %v340 = vld [vmem:[%s278] sm:$0x1]
        %342 = vset.pattern.permute.xlu0 0
        %343 = vperm.xlu0 %342, %v338
        %v344 = vpop.permute.xlu0 %343
        %347 = vset.pattern.permute.xlu0 0
        %348 = vperm.xlu0 %347, %v339
        %v349 = vpop.permute.xlu0 %348
        %v352 = vlaneseq
        %v353 = vshrl.u32 %v352, 7
        %v354 = vsub.s32 0, %v353
        %v355 = vrot.slane %v340, %v354
        %v357 = vadd.f32 %v344, %v355
        %v358 = vadd.f32 %v349, %v355
        %v359 = vmul.f32 %v357, 0.2
        %v360 = vmul.f32 %v358, 0.2
        %v361 = vmax.f32 %v357, %v359
        %v362 = vmax.f32 %v358, %v360
        %v363 = vld [vmem:[%s270] sm:$0x3]
        %v364 = vld [vmem:[%s270 + $0x2] sm:$0x3]
        %v365 = vunpack.c.0.s8 %v363
        %v366 = vunpack.c.0.s8 %v364
        %v367 = vcvt.s32.f32 %v365
        %v368 = vcvt.s32.f32 %v366
        %vm369 = vcmp.gt.f32.partialorder %v367, 0.0
        %vm370 = vcmp.gt.f32.partialorder %v368, 0.0
        %v371 = vsel %vm369, %v361, -9e+15
        %v372 = vsel %vm370, %v362, -9e+15
        %vm373 = vcmask 130048
        %v374 = vsel %vm373, %v371, -inf
        %375 = vmax.xlane.f32.xlu0 %v374
        %v376 = vpop.xlane.xlu0 %375
        %v377 = vsel %vm373, %v372, -inf
        %378 = vmax.xlane.f32.xlu0 %v377
        %v379 = vpop.xlane.xlu0 %378
        %v380 = vsub.f32 %v371, %v376
        %v381 = vsub.f32 %v372, %v379
        %v382 = vmul.f32 %v380, 1.442695
        %v383 = vpow.pop %v382
        %v384 = vmul.f32 %v381, 1.442695
        %v385 = vpow.pop %v384
        %v386 = vsel %vm373, %v383, 0.0
        %387 = vadd.xlane.f32.xlu0 %v386
        %v388 = vpop.xlane.xlu0 %387
        %v389 = vsel %vm373, %v385, 0.0
        %390 = vadd.xlane.f32.xlu0 %v389
        %v391 = vpop.xlane.xlu0 %390
        %v392 = vrcp.pop %v388
        %v393 = vrcp.pop %v391
        %v394 = vmul.f32 %v383, %v392
        %v395 = vmul.f32 %v385, %v393
        %v396 = vpack.c.bf16 %v395, %v394
        %v397 = vpack.c.bf16 %v335, %v332
        %v399 = vsel %vm373, %v396, 0
        %401 = vmatprep.subr.bf16.mxu0 0
        %402 = vmatpush1.bf16.msra.mxu0 %v397
        %403 = vmatprep.subr.bf16.mxu0 0
        %404 = vmatpush1.bf16.msra.mxu0 0
        %405 = vmatprep.subr.bf16.mxu0 0
        %406 = vmatpush1.bf16.msra.mxu0 0
        %407 = vmatprep.subr.bf16.mxu0 0
        %408 = vmatpush1.bf16.msra.mxu0 0
        %409 = vmatprep.subr.bf16.mxu0 0
        %410 = vmatpush1.bf16.msra.mxu0 0
        %411 = vmatprep.subr.bf16.mxu0 0
        %412 = vmatpush1.bf16.msra.mxu0 0
        %413 = vmatprep.subr.bf16.mxu0 0
        %414 = vmatpush1.bf16.msra.mxu0 0
        %415 = vmatprep.subr.bf16.mxu0 0
        %416 = vmatpush1.bf16.msra.mxu0 0
        %417 = vmatprep.subr.bf16.mxu0 0
        %418 = vmatpush1.bf16.msra.mxu0 0
        %419 = vmatprep.subr.bf16.mxu0 0
        %420 = vmatpush1.bf16.msra.mxu0 0
        %421 = vmatprep.subr.bf16.mxu0 0
        %422 = vmatpush1.bf16.msra.mxu0 0
        %423 = vmatprep.subr.bf16.mxu0 0
        %424 = vmatpush1.bf16.msra.mxu0 0
        %425 = vmatprep.subr.bf16.mxu0 0
        %426 = vmatpush1.bf16.msra.mxu0 0
        %427 = vmatprep.subr.bf16.mxu0 0
        %428 = vmatpush1.bf16.msra.mxu0 0
        %429 = vmatprep.subr.bf16.mxu0 0
        %430 = vmatpush1.bf16.msra.mxu0 0
        %431 = vmatprep.subr.bf16.mxu0 0
        %432 = vmatpush1.bf16.msra.mxu0 0
        %433 = vmatprep.mubr.bf16.mxu0 0
        %434 = vmatmul.mubr.bf16.gmra.mrb[0].mxu0 %v399
        %v435 = vpop.f32.mrb[0].mxu0
        %v436 = vadd.f32 0.0, %v435
        %v437 = vpop.f32.mrb[0].mxu0
        %v438 = vpop.f32.mrb[0].mxu0
        %v439 = vadd.f32 0.0, %v438
        %v440 = vpop.f32.mrb[0].mxu0
        %441 = vdwg.mxu0
        %vm442 = vcmp.gt.f32.partialorder %v436, 0.0
        %vm443 = vcmp.gt.f32.partialorder %v439, 0.0
        %v444 = vmin.f32 %v436, 0.0
        %v445 = vmin.f32 %v439, 0.0
        %v446 = vmul.f32 %v444, 1.442695
        %v447 = vpow.pop %v446
        %v448 = vmul.f32 %v445, 1.442695
        %v449 = vpow.pop %v448
        %v450 = vsub.f32 %v447, 1.0
        %v451 = vsub.f32 %v449, 1.0
        %v452 = vsel %vm442, %v436, %v450
        %v453 = vsel %vm443, %v439, %v451
        %vm454 = vcmask 261120
        %455 = vst.msk [vmem:[%s259] sm:$0xff] %vm454, %v452
        %456 = vst.msk [vmem:[%s259 + $0x8] sm:$0xff] %vm454, %v453
        %s457 = sand.u32 %s152, 1
        %s458 = scalar_lea.sflag [#allocation3], %s457
        %s459 = sand.u32 %s152, 1
        %s460 = smul.addr %s459, 16
        %s461 = scalar_lea.vmem [#allocation2], %s460
        // Predicated region
        $region41: #{tpu_custom_call.1} parent=39 // pred_check
          %p462 = pneg %p162
        $region42: #{tpu_custom_call.1} parent=39 // pred_check_branch
          %464 = sbr.rel (%p462) target = $region44
        $region43: #{tpu_custom_call.1} parent=39 // pred_region
          %s465 = smul.u32 2, %s19
          %s467 = ssub.s32 256, 256
          %468 = vsyncadd %s458, %s467
          %s469 = smul.addr %s465, 128
          %s470 = scalar_lea.hbm %s5, %s469
          %s471 = sshll.u32 %s461, 4
          %s472 = int_to_ptr.vmem [resolvable:$true] %s471
          %477 = dma.vmem_to_hbm [thread:$0]  %s472, 256, %s470, %s458, 128, 128, 8
        $region44: #{tpu_custom_call.1} parent=39 // pred_fallthru
          _
      $region40: #{tpu_custom_call.1} parent=5 // pred_fallthru
        _
      %p478 = scmp.le.s32.totalorder 2, %s14
      // Predicated region
      $region45: #{tpu_custom_call.1} parent=5 // pred_check
        %p479 = pneg %p478
      $region46: #{tpu_custom_call.1} parent=5 // pred_check_branch
        %481 = sbr.rel (%p479) target = $region48
      $region47: #{tpu_custom_call.1} parent=5 // pred_region
        %s482 = ssub.s32 %s14, 2
        // Predicated region
        $region49: #{tpu_custom_call.1} parent=47 // pred_check
          %p483 = pneg %p168
        $region50: #{tpu_custom_call.1} parent=47 // pred_check_branch
          %485 = sbr.rel (%p483) target = $region52
        $region51: #{tpu_custom_call.1} parent=47 // pred_region
          %s486 = sand.u32 %s153, 1
          %s487 = scalar_lea.sflag [#allocation3], %s486
          %s488 = sand.u32 %s153, 1
          %s489 = smul.addr %s488, 16
          %s490 = scalar_lea.vmem [#allocation2], %s489
          %491 = dma.done %s487, 256
        $region52: #{tpu_custom_call.1} parent=47 // pred_fallthru
          _
      $region48: #{tpu_custom_call.1} parent=5 // pred_fallthru
        _
    $region6: #{tpu_custom_call.1} parent=1 // loop_footer
      %s18 = sadd.s32 1, %s14
    $region7: #{tpu_custom_call.1} parent=1 // loop_footer_branch
      %13 = sbr.rel target = $region3
    $region8: #{tpu_custom_call.1} parent=1 // loop_exit
      _
    %492 = vsyncpa [#allocation3], 1
    %s493 = scalar_lea.sflag [#allocation3], 1
    %494 = vsyncpa %s493, 1

</llo_original>
